<compile_context>
chip_gen: v6e
topology: v6e:2x2x1
jax: 0.10.0
libtpu: 0.0.40
codegen_flags: <defaults>
</compile_context>

<pallas_src>
import math

import jax
import jax.numpy as jnp
from jax import lax
from jax.experimental import pallas as pl
from jax.experimental.pallas import tpu as pltpu

# Problem sizes (small, per instructions).
N = 16            # number of graph nodes
F = 16            # input_size
H = 4             # num_heads
D = 8             # hidden_size (per head)
HD = H * D        # concatenated output width (32)
PROJ_W = 4 * HD   # packed q|k|v|skip projection width (128, lane-dense)
OUT_W = 128       # lane-dense output slab; valid data in [:, :HD]
LN_EPS = 1e-5     # PyTorch LayerNorm default eps
NEG_INF = -1e30


def transformer_conv_kernel(x_ref, adj_ref, bias_ref, w_ref, aux_ref, out_ref):
    x = x_ref[...]          # [N, F]
    adj = adj_ref[...]      # [N_dst, N_src] multiplicative 0/1 mask
    bias = bias_ref[...]    # [N_dst, N_src] additive 0 / -1e30 mask (host-built)
    aux = aux_ref[...]      # [3, PROJ_W]: row0 packed biases, row1 gamma, row2 beta

    # Fused q|k|v|skip projection: one [N,F] x [F,4*HD] MXU pass, lane-dense 128.
    # q lanes already carry the 1/sqrt(D) attention scale (folded at pack time).
    proj = jnp.dot(x, w_ref[...], preferred_element_type=jnp.float32) + aux[0:1, :]

    # Unrolled per-head attention on lane slices of proj (no sublane repacking).
    head_outs = []
    for h in range(H):
        q_h = proj[:, h * D:(h + 1) * D]                         # [N, D]
        k_h = proj[:, HD + h * D:HD + (h + 1) * D]               # [N, D]
        v_h = proj[:, 2 * HD + h * D:2 * HD + (h + 1) * D]       # [N, D]

        # s[i, j] = <q_h[dst i], k_h[src j]>, masked additively.
        s = lax.dot_general(q_h, k_h, (((1,), (1,)), ((), ())),
                            preferred_element_type=jnp.float32) + bias  # [N, N]

        # edge_softmax over incoming edges of each destination row.
        m = jnp.max(s, axis=-1, keepdims=True)
        e = jnp.exp(s - m) * adj
        denom = jnp.sum(e, axis=-1, keepdims=True)
        # Exact, NaN-free normalization; rows with zero in-degree get alpha = 0.
        alpha = e / jnp.where(denom > 0.0, denom, 1.0)                  # [N, N]

        head_outs.append(jnp.dot(alpha, v_h,
                                 preferred_element_type=jnp.float32))   # [N, D]

    # concat=True: heads side by side on the lane dim.
    agg = jnp.concatenate(head_outs, axis=1)        # [N, HD]
    skip = proj[:, 3 * HD:4 * HD]                   # [N, HD]
    out = agg + skip                                # skip connection (gate=False)

    # LayerNorm over the feature dim (biased variance, eps=1e-5).
    mu = jnp.mean(out, axis=-1, keepdims=True)
    var = jnp.mean((out - mu) ** 2, axis=-1, keepdims=True)
    out = (out - mu) * lax.rsqrt(var + LN_EPS)
    out = out * aux[1:2, :HD] + aux[2:3, :HD]       # gamma / beta

    # Lane-dense store: write a full 128-lane slab (caller slices [:, :HD]).
    out_ref[...] = jnp.concatenate(
        [out, jnp.zeros((N, OUT_W - HD), jnp.float32)], axis=1)   # activation=None


@jax.jit
def transformer_conv(x, adj, adj_bias, w_all, aux):
    """Single fused TransformerConv forward (one graph, one kernel invocation)."""
    vmem = lambda: pl.BlockSpec(memory_space=pltpu.MemorySpace.VMEM)
    out = pl.pallas_call(
        transformer_conv_kernel,
        out_shape=jax.ShapeDtypeStruct((N, OUT_W), jnp.float32),
        in_specs=[vmem() for _ in range(5)],
        out_specs=vmem(),
    )(x, adj, adj_bias, w_all, aux)
    return out[:, :HD]


def pack_params(params):
    """Pack the 10 PyTorch-style parameter arrays into 2 kernel inputs.

    - w_all: [F, 4*HD] = concat(Wq/sqrt(D), Wk, Wv, Wskip) along the output dim.
    - aux:   [3, 4*HD] = rows (packed biases with bq scaled, gamma padded, beta padded).
    The 1/sqrt(D) attention scale is folded into Wq/bq here (compile-time).
    """
    wq, bq, wk, bk, wv, bv, ws, bs, gamma, beta = params
    scale = 1.0 / math.sqrt(D)
    w_all = jnp.concatenate([wq * scale, wk, wv, ws], axis=1)        # [F, 4*HD]
    b_all = jnp.concatenate([bq * scale, bk, bv, bs], axis=1)        # [1, 4*HD]
    pad = PROJ_W - HD
    gamma_p = jnp.pad(gamma, ((0, 0), (0, pad)))
    beta_p = jnp.pad(beta, ((0, 0), (0, pad)))
    aux = jnp.concatenate([b_all, gamma_p, beta_p], axis=0)          # [3, 4*HD]
    return w_all, aux


def ref_forward(x, adj, params):
    """Pure-JAX reference of the same forward pass (for validation)."""
    wq, bq, wk, bk, wv, bv, ws, bs, gamma, beta = params
    q = ((x @ wq + bq) / math.sqrt(D)).reshape(N, H, D)
    k = (x @ wk + bk).reshape(N, H, D)
    v = (x @ wv + bv).reshape(N, H, D)
    skip = x @ ws + bs
    s = jnp.einsum('ihd,jhd->hij', q, k)
    s = jnp.where(adj[None] > 0.0, s, NEG_INF)
    e = jnp.exp(s - s.max(-1, keepdims=True)) * adj[None]
    denom = e.sum(-1, keepdims=True)
    alpha = e / jnp.where(denom > 0.0, denom, 1.0)
    agg = jnp.einsum('hij,jhd->ihd', alpha, v).reshape(N, HD)
    out = agg + skip
    mu = out.mean(-1, keepdims=True)
    var = ((out - mu) ** 2).mean(-1, keepdims=True)
    return (out - mu) / jnp.sqrt(var + LN_EPS) * gamma + beta


def init_params(key):
    """Deterministic init matching nn.Linear / nn.LayerNorm shapes.

    PyTorch Linear weight is [out, in]; we store the transposed [in, out]
    layout so the kernel can do x @ W.  Biases are kept 2-D ([1, out]).
    """
    keys = jax.random.split(key, 8)
    bound = 1.0 / math.sqrt(F)

    def lin(kw, kb, out_dim):
        w = jax.random.uniform(kw, (F, out_dim), jnp.float32, -bound, bound)
        b = jax.random.uniform(kb, (1, out_dim), jnp.float32, -bound, bound)
        return w, b

    wq, bq = lin(keys[0], keys[1], HD)
    wk, bk = lin(keys[2], keys[3], HD)
    wv, bv = lin(keys[4], keys[5], HD)
    ws, bs = lin(keys[6], keys[7], HD)      # skip_feat (concat=True -> H*D)
    gamma = jnp.ones((1, HD), jnp.float32)  # LayerNorm weight
    beta = jnp.zeros((1, HD), jnp.float32)  # LayerNorm bias
    return (wq, bq, wk, bk, wv, bv, ws, bs, gamma, beta)


if __name__ == "__main__":
    key = jax.random.PRNGKey(0)
    k_feat, k_adj, k_par = jax.random.split(key, 3)

    # Node features [N, F].
    x = jax.random.normal(k_feat, (N, F), jnp.float32)

    # Random sparse graph + self-loops (so every dst has >=1 incoming edge).
    adj = (jax.random.uniform(k_adj, (N, N)) < 0.3).astype(jnp.float32)
    adj = jnp.maximum(adj, jnp.eye(N, dtype=jnp.float32))
    # Host-precomputed additive mask (review: no in-kernel mask construction).
    adj_bias = jnp.where(adj > 0.0, 0.0, NEG_INF).astype(jnp.float32)

    params = init_params(k_par)
    w_all, aux = pack_params(params)

    out = transformer_conv(x, adj, adj_bias, w_all, aux)
    out = jax.block_until_ready(out)

    expected = ref_forward(x, adj, params)
    assert out.shape == (N, HD)
    max_err = float(jnp.max(jnp.abs(out - expected)))
    assert jnp.allclose(out, expected, atol=2e-3, rtol=2e-3), (
        f"Pallas kernel output mismatch vs pure-JAX reference (max abs err {max_err})")

    print("KERNEL_OK")
</pallas_src>

<mosaic_0001>
module attributes {stable_mosaic.version = 11 : i64} {
  func.func @transformer_conv_kernel(%arg0: memref<16x16xf32, #tpu.memory_space<vmem>>, %arg1: memref<16x16xf32, #tpu.memory_space<vmem>>, %arg2: memref<16x16xf32, #tpu.memory_space<vmem>>, %arg3: memref<16x128xf32, #tpu.memory_space<vmem>>, %arg4: memref<3x128xf32, #tpu.memory_space<vmem>>, %arg5: memref<16x128xf32, #tpu.memory_space<vmem>>) attributes {dimension_semantics = [], scalar_prefetch = 0 : i64, scratch_operands = 0 : i64, tpu.core_type = #tpu.core_type<tc>} {
    %c0 = arith.constant 0 : index
    %c0_0 = arith.constant 0 : index
    %0 = vector.load %arg0[%c0, %c0_0] : memref<16x16xf32, #tpu.memory_space<vmem>>, vector<16x16xf32>
    %c0_1 = arith.constant 0 : index
    %c0_2 = arith.constant 0 : index
    %1 = vector.load %arg1[%c0_1, %c0_2] : memref<16x16xf32, #tpu.memory_space<vmem>>, vector<16x16xf32>
    %c0_3 = arith.constant 0 : index
    %c0_4 = arith.constant 0 : index
    %2 = vector.load %arg2[%c0_3, %c0_4] : memref<16x16xf32, #tpu.memory_space<vmem>>, vector<16x16xf32>
    %c0_5 = arith.constant 0 : index
    %c0_6 = arith.constant 0 : index
    %3 = vector.load %arg4[%c0_5, %c0_6] : memref<3x128xf32, #tpu.memory_space<vmem>>, vector<3x128xf32>
    %c0_7 = arith.constant 0 : index
    %c0_8 = arith.constant 0 : index
    %4 = vector.load %arg3[%c0_7, %c0_8] : memref<16x128xf32, #tpu.memory_space<vmem>>, vector<16x128xf32>
    %cst = arith.constant dense<0.000000e+00> : vector<16x128xf32>
    %5 = tpu.matmul %0, %4, %cst {dimension_numbers = #tpu.dot_dimension_numbers<[1], [0], [0], [1], [0, 0, 1, 1], [], []>} : vector<16x16xf32>, vector<16x128xf32>, vector<16x128xf32> -> vector<16x128xf32>
    %6 = vector.extract_strided_slice %3 {offsets = [0, 0], sizes = [1, 128], strides = [1, 1]} : vector<3x128xf32> to vector<1x128xf32>
    %7 = vector.broadcast %6 : vector<1x128xf32> to vector<16x128xf32>
    %8 = arith.addf %5, %7 : vector<16x128xf32>
    %9 = vector.extract_strided_slice %8 {offsets = [0, 0], sizes = [16, 8], strides = [1, 1]} : vector<16x128xf32> to vector<16x8xf32>
    %10 = vector.extract_strided_slice %8 {offsets = [0, 32], sizes = [16, 8], strides = [1, 1]} : vector<16x128xf32> to vector<16x8xf32>
    %11 = vector.extract_strided_slice %8 {offsets = [0, 64], sizes = [16, 8], strides = [1, 1]} : vector<16x128xf32> to vector<16x8xf32>
    %cst_9 = arith.constant dense<0.000000e+00> : vector<16x16xf32>
    %12 = tpu.matmul %9, %10, %cst_9 {dimension_numbers = #tpu.dot_dimension_numbers<[1], [1], [0], [0], [0, 0, 1, 0], [], []>} : vector<16x8xf32>, vector<16x8xf32>, vector<16x16xf32> -> vector<16x16xf32>
    %13 = arith.addf %12, %2 : vector<16x16xf32>
    %cst_10 = arith.constant dense<0xFF800000> : vector<16xf32>
    %14 = vector.multi_reduction <maximumf>, %13, %cst_10 [1] : vector<16x16xf32> to vector<16xf32>
    %15 = vector.shape_cast %14 : vector<16xf32> to vector<16x1xf32>
    %16 = vector.broadcast %15 : vector<16x1xf32> to vector<16x16xf32>
    %17 = arith.subf %13, %16 : vector<16x16xf32>
    %18 = math.exp %17 : vector<16x16xf32>
    %19 = arith.mulf %18, %1 : vector<16x16xf32>
    %cst_11 = arith.constant dense<0.000000e+00> : vector<16xf32>
    %20 = vector.multi_reduction <add>, %19, %cst_11 [1] : vector<16x16xf32> to vector<16xf32>
    %21 = vector.shape_cast %20 : vector<16xf32> to vector<16x1xf32>
    %cst_12 = arith.constant 0.000000e+00 : f32
    %22 = vector.broadcast %cst_12 : f32 to vector<16x1xf32>
    %23 = arith.cmpf ogt, %21, %22 : vector<16x1xf32>
    %cst_13 = arith.constant 1.000000e+00 : f32
    %24 = vector.broadcast %cst_13 : f32 to vector<16x1xf32>
    %25 = arith.select %23, %21, %24 : vector<16x1xi1>, vector<16x1xf32>
    %26 = vector.broadcast %25 : vector<16x1xf32> to vector<16x16xf32>
    %27 = arith.divf %19, %26 : vector<16x16xf32>
    %cst_14 = arith.constant dense<0.000000e+00> : vector<16x8xf32>
    %28 = tpu.matmul %27, %11, %cst_14 {dimension_numbers = #tpu.dot_dimension_numbers<[1], [0], [0], [1], [0, 0, 1, 1], [], []>} : vector<16x16xf32>, vector<16x8xf32>, vector<16x8xf32> -> vector<16x8xf32>
    %29 = vector.extract_strided_slice %8 {offsets = [0, 8], sizes = [16, 8], strides = [1, 1]} : vector<16x128xf32> to vector<16x8xf32>
    %30 = vector.extract_strided_slice %8 {offsets = [0, 40], sizes = [16, 8], strides = [1, 1]} : vector<16x128xf32> to vector<16x8xf32>
    %31 = vector.extract_strided_slice %8 {offsets = [0, 72], sizes = [16, 8], strides = [1, 1]} : vector<16x128xf32> to vector<16x8xf32>
    %cst_15 = arith.constant dense<0.000000e+00> : vector<16x16xf32>
    %32 = tpu.matmul %29, %30, %cst_15 {dimension_numbers = #tpu.dot_dimension_numbers<[1], [1], [0], [0], [0, 0, 1, 0], [], []>} : vector<16x8xf32>, vector<16x8xf32>, vector<16x16xf32> -> vector<16x16xf32>
    %33 = arith.addf %32, %2 : vector<16x16xf32>
    %cst_16 = arith.constant dense<0xFF800000> : vector<16xf32>
    %34 = vector.multi_reduction <maximumf>, %33, %cst_16 [1] : vector<16x16xf32> to vector<16xf32>
    %35 = vector.shape_cast %34 : vector<16xf32> to vector<16x1xf32>
    %36 = vector.broadcast %35 : vector<16x1xf32> to vector<16x16xf32>
    %37 = arith.subf %33, %36 : vector<16x16xf32>
    %38 = math.exp %37 : vector<16x16xf32>
    %39 = arith.mulf %38, %1 : vector<16x16xf32>
    %cst_17 = arith.constant dense<0.000000e+00> : vector<16xf32>
    %40 = vector.multi_reduction <add>, %39, %cst_17 [1] : vector<16x16xf32> to vector<16xf32>
    %41 = vector.shape_cast %40 : vector<16xf32> to vector<16x1xf32>
    %cst_18 = arith.constant 0.000000e+00 : f32
    %42 = vector.broadcast %cst_18 : f32 to vector<16x1xf32>
    %43 = arith.cmpf ogt, %41, %42 : vector<16x1xf32>
    %cst_19 = arith.constant 1.000000e+00 : f32
    %44 = vector.broadcast %cst_19 : f32 to vector<16x1xf32>
    %45 = arith.select %43, %41, %44 : vector<16x1xi1>, vector<16x1xf32>
    %46 = vector.broadcast %45 : vector<16x1xf32> to vector<16x16xf32>
    %47 = arith.divf %39, %46 : vector<16x16xf32>
    %cst_20 = arith.constant dense<0.000000e+00> : vector<16x8xf32>
    %48 = tpu.matmul %47, %31, %cst_20 {dimension_numbers = #tpu.dot_dimension_numbers<[1], [0], [0], [1], [0, 0, 1, 1], [], []>} : vector<16x16xf32>, vector<16x8xf32>, vector<16x8xf32> -> vector<16x8xf32>
    %49 = vector.extract_strided_slice %8 {offsets = [0, 16], sizes = [16, 8], strides = [1, 1]} : vector<16x128xf32> to vector<16x8xf32>
    %50 = vector.extract_strided_slice %8 {offsets = [0, 48], sizes = [16, 8], strides = [1, 1]} : vector<16x128xf32> to vector<16x8xf32>
    %51 = vector.extract_strided_slice %8 {offsets = [0, 80], sizes = [16, 8], strides = [1, 1]} : vector<16x128xf32> to vector<16x8xf32>
    %cst_21 = arith.constant dense<0.000000e+00> : vector<16x16xf32>
    %52 = tpu.matmul %49, %50, %cst_21 {dimension_numbers = #tpu.dot_dimension_numbers<[1], [1], [0], [0], [0, 0, 1, 0], [], []>} : vector<16x8xf32>, vector<16x8xf32>, vector<16x16xf32> -> vector<16x16xf32>
    %53 = arith.addf %52, %2 : vector<16x16xf32>
    %cst_22 = arith.constant dense<0xFF800000> : vector<16xf32>
    %54 = vector.multi_reduction <maximumf>, %53, %cst_22 [1] : vector<16x16xf32> to vector<16xf32>
    %55 = vector.shape_cast %54 : vector<16xf32> to vector<16x1xf32>
    %56 = vector.broadcast %55 : vector<16x1xf32> to vector<16x16xf32>
    %57 = arith.subf %53, %56 : vector<16x16xf32>
    %58 = math.exp %57 : vector<16x16xf32>
    %59 = arith.mulf %58, %1 : vector<16x16xf32>
    %cst_23 = arith.constant dense<0.000000e+00> : vector<16xf32>
    %60 = vector.multi_reduction <add>, %59, %cst_23 [1] : vector<16x16xf32> to vector<16xf32>
    %61 = vector.shape_cast %60 : vector<16xf32> to vector<16x1xf32>
    %cst_24 = arith.constant 0.000000e+00 : f32
    %62 = vector.broadcast %cst_24 : f32 to vector<16x1xf32>
    %63 = arith.cmpf ogt, %61, %62 : vector<16x1xf32>
    %cst_25 = arith.constant 1.000000e+00 : f32
    %64 = vector.broadcast %cst_25 : f32 to vector<16x1xf32>
    %65 = arith.select %63, %61, %64 : vector<16x1xi1>, vector<16x1xf32>
    %66 = vector.broadcast %65 : vector<16x1xf32> to vector<16x16xf32>
    %67 = arith.divf %59, %66 : vector<16x16xf32>
    %cst_26 = arith.constant dense<0.000000e+00> : vector<16x8xf32>
    %68 = tpu.matmul %67, %51, %cst_26 {dimension_numbers = #tpu.dot_dimension_numbers<[1], [0], [0], [1], [0, 0, 1, 1], [], []>} : vector<16x16xf32>, vector<16x8xf32>, vector<16x8xf32> -> vector<16x8xf32>
    %69 = vector.extract_strided_slice %8 {offsets = [0, 24], sizes = [16, 8], strides = [1, 1]} : vector<16x128xf32> to vector<16x8xf32>
    %70 = vector.extract_strided_slice %8 {offsets = [0, 56], sizes = [16, 8], strides = [1, 1]} : vector<16x128xf32> to vector<16x8xf32>
    %71 = vector.extract_strided_slice %8 {offsets = [0, 88], sizes = [16, 8], strides = [1, 1]} : vector<16x128xf32> to vector<16x8xf32>
    %cst_27 = arith.constant dense<0.000000e+00> : vector<16x16xf32>
    %72 = tpu.matmul %69, %70, %cst_27 {dimension_numbers = #tpu.dot_dimension_numbers<[1], [1], [0], [0], [0, 0, 1, 0], [], []>} : vector<16x8xf32>, vector<16x8xf32>, vector<16x16xf32> -> vector<16x16xf32>
    %73 = arith.addf %72, %2 : vector<16x16xf32>
    %cst_28 = arith.constant dense<0xFF800000> : vector<16xf32>
    %74 = vector.multi_reduction <maximumf>, %73, %cst_28 [1] : vector<16x16xf32> to vector<16xf32>
    %75 = vector.shape_cast %74 : vector<16xf32> to vector<16x1xf32>
    %76 = vector.broadcast %75 : vector<16x1xf32> to vector<16x16xf32>
    %77 = arith.subf %73, %76 : vector<16x16xf32>
    %78 = math.exp %77 : vector<16x16xf32>
    %79 = arith.mulf %78, %1 : vector<16x16xf32>
    %cst_29 = arith.constant dense<0.000000e+00> : vector<16xf32>
    %80 = vector.multi_reduction <add>, %79, %cst_29 [1] : vector<16x16xf32> to vector<16xf32>
    %81 = vector.shape_cast %80 : vector<16xf32> to vector<16x1xf32>
    %cst_30 = arith.constant 0.000000e+00 : f32
    %82 = vector.broadcast %cst_30 : f32 to vector<16x1xf32>
    %83 = arith.cmpf ogt, %81, %82 : vector<16x1xf32>
    %cst_31 = arith.constant 1.000000e+00 : f32
    %84 = vector.broadcast %cst_31 : f32 to vector<16x1xf32>
    %85 = arith.select %83, %81, %84 : vector<16x1xi1>, vector<16x1xf32>
    %86 = vector.broadcast %85 : vector<16x1xf32> to vector<16x16xf32>
    %87 = arith.divf %79, %86 : vector<16x16xf32>
    %cst_32 = arith.constant dense<0.000000e+00> : vector<16x8xf32>
    %88 = tpu.matmul %87, %71, %cst_32 {dimension_numbers = #tpu.dot_dimension_numbers<[1], [0], [0], [1], [0, 0, 1, 1], [], []>} : vector<16x16xf32>, vector<16x8xf32>, vector<16x8xf32> -> vector<16x8xf32>
    %89 = tpu.concatenate %28, %48, %68, %88 in 1 : vector<16x8xf32>, vector<16x8xf32>, vector<16x8xf32>, vector<16x8xf32> -> vector<16x32xf32>
    %90 = vector.extract_strided_slice %8 {offsets = [0, 96], sizes = [16, 32], strides = [1, 1]} : vector<16x128xf32> to vector<16x32xf32>
    %91 = arith.addf %89, %90 : vector<16x32xf32>
    %cst_33 = arith.constant dense<0.000000e+00> : vector<16xf32>
    %92 = vector.multi_reduction <add>, %91, %cst_33 [1] : vector<16x32xf32> to vector<16xf32>
    %93 = vector.shape_cast %92 : vector<16xf32> to vector<16x1xf32>
    %cst_34 = arith.constant 3.200000e+01 : f32
    %94 = vector.broadcast %cst_34 : f32 to vector<16x1xf32>
    %95 = arith.divf %93, %94 : vector<16x1xf32>
    %96 = vector.broadcast %95 : vector<16x1xf32> to vector<16x32xf32>
    %97 = arith.subf %91, %96 : vector<16x32xf32>
    %98 = arith.mulf %97, %97 : vector<16x32xf32>
    %cst_35 = arith.constant dense<0.000000e+00> : vector<16xf32>
    %99 = vector.multi_reduction <add>, %98, %cst_35 [1] : vector<16x32xf32> to vector<16xf32>
    %100 = vector.shape_cast %99 : vector<16xf32> to vector<16x1xf32>
    %cst_36 = arith.constant 3.200000e+01 : f32
    %101 = vector.broadcast %cst_36 : f32 to vector<16x1xf32>
    %102 = arith.divf %100, %101 : vector<16x1xf32>
    %103 = vector.broadcast %95 : vector<16x1xf32> to vector<16x32xf32>
    %104 = arith.subf %91, %103 : vector<16x32xf32>
    %cst_37 = arith.constant 9.99999974E-6 : f32
    %105 = vector.broadcast %cst_37 : f32 to vector<16x1xf32>
    %106 = arith.addf %102, %105 : vector<16x1xf32>
    %107 = math.rsqrt %106 : vector<16x1xf32>
    %108 = vector.broadcast %107 : vector<16x1xf32> to vector<16x32xf32>
    %109 = arith.mulf %104, %108 : vector<16x32xf32>
    %110 = vector.extract_strided_slice %3 {offsets = [1, 0], sizes = [1, 32], strides = [1, 1]} : vector<3x128xf32> to vector<1x32xf32>
    %111 = vector.broadcast %110 : vector<1x32xf32> to vector<16x32xf32>
    %112 = arith.mulf %109, %111 : vector<16x32xf32>
    %113 = vector.extract_strided_slice %3 {offsets = [2, 0], sizes = [1, 32], strides = [1, 1]} : vector<3x128xf32> to vector<1x32xf32>
    %114 = vector.broadcast %113 : vector<1x32xf32> to vector<16x32xf32>
    %115 = arith.addf %112, %114 : vector<16x32xf32>
    %cst_38 = arith.constant 0.000000e+00 : f32
    %116 = vector.broadcast %cst_38 : f32 to vector<16x96xf32>
    %117 = tpu.concatenate %115, %116 in 1 : vector<16x32xf32>, vector<16x96xf32> -> vector<16x128xf32>
    %c0_39 = arith.constant 0 : index
    %c0_40 = arith.constant 0 : index
    %118 = vector.load %arg5[%c0_39, %c0_40] : memref<16x128xf32, #tpu.memory_space<vmem>>, vector<16x128xf32>
    tpu.vector_store %arg5[%c0_39, %c0_40], %117 {strides = array<i32>} : memref<16x128xf32, #tpu.memory_space<vmem>>, vector<16x128xf32>,
    return
  }
}

</mosaic_0001>

<llo_original>
// kernel: transformer_conv.1
$region0: #{transformer_conv.1}
  #allocation0 [shape = 'u32[]', space=smem, size = 0x4, offset = 0x4, fixed_abs, tag = 'smem constant byte address 0x4 - core index']
  #allocation1 [shape = 'u32[144,128]{1,0:T(1,128)}', space=vmem, size = 0x12000, scoped, tag = 'internal scratch']
  %s0 = inlined_call_operand.hbm [shape: f32[16,16], index: 0, kind: input, shape index: {}]
  %s1 = inlined_call_operand.hbm [shape: f32[16,16], index: 1, kind: input, shape index: {}]
  %s2 = inlined_call_operand.hbm [shape: f32[16,16], index: 2, kind: input, shape index: {}]
  %s3 = inlined_call_operand.hbm [shape: f32[16,128], index: 3, kind: input, shape index: {}]
  %s4 = inlined_call_operand.vmem [shape: f32[3,128], index: 4, kind: input, shape index: {}]
  %s5 = inlined_call_operand.hbm [shape: f32[16,128], index: 5, kind: output, shape index: {}]
  %s6 = sld [smem:[#allocation0]]
  $region46: #{transformer_conv.1} parent=0
    _
  %s8 = ssub.s32 1, %s6
  %s9 = scalar_select 0, %s8, %s6
  $region1: #{transformer_conv.1} parent=0
    #allocation2 [shape = 'u8[8192]{0}', space=vmem, size = 0x2000, scoped, tag = 'input window, operand 0, single buffered']
    #allocation3 [shape = 's32[1]{0}', space=sflag, size = 0x4, scoped, tag = 'scoped memory for transformer_conv.1']
    #allocation4 [shape = 's32[1]{0}', space=sflag, size = 0x4, scoped, tag = 'scoped memory for transformer_conv.1']
    #allocation5 [shape = 'u8[8192]{0}', space=vmem, size = 0x2000, scoped, tag = 'input window, operand 1, single buffered']
    #allocation6 [shape = 's32[1]{0}', space=sflag, size = 0x4, scoped, tag = 'scoped memory for transformer_conv.1']
    #allocation7 [shape = 'u8[8192]{0}', space=vmem, size = 0x2000, scoped, tag = 'input window, operand 2, single buffered']
    #allocation8 [shape = 'u8[8192]{0}', space=vmem, size = 0x2000, scoped, tag = 'input window, operand 3, single buffered']
    #allocation9 [shape = 's32[1]{0}', space=sflag, size = 0x4, scoped, tag = 'scoped memory for transformer_conv.1']
    #allocation10 [shape = 'u8[8192]{0}', space=vmem, size = 0x2000, scoped, tag = 'output window, operand 0, single buffered']
    %10 = vsyncpa [#allocation3], 0
    %11 = vsyncpa [#allocation6], 0
    %12 = vsyncpa [#allocation9], 0
    %13 = vsyncpa [#allocation4], 0
    // Predicated region
    $region2: #{transformer_conv.1} parent=1 // pred_check
      _
    $region3: #{transformer_conv.1} parent=1 // pred_check_branch
      %15 = sbr.rel (0) target = $region5
    $region4: #{transformer_conv.1} parent=1 // pred_region
      %s17 = ssub.s32 256, 256
      %18 = vsyncadd [#allocation3], %s17
      %s19 = sshll.u32 [#allocation2], 4
      %s20 = int_to_ptr.vmem [resolvable:$true] %s19
      %25 = dma.hbm_to_vmem [thread:$0]  %s0, 256, %s20, [#allocation3], 128, 128, 8
    $region5: #{transformer_conv.1} parent=1 // pred_fallthru
      _
    // Predicated region
    $region6: #{transformer_conv.1} parent=1 // pred_check
      _
    $region7: #{transformer_conv.1} parent=1 // pred_check_branch
      %27 = sbr.rel (0) target = $region9
    $region8: #{transformer_conv.1} parent=1 // pred_region
      %s29 = ssub.s32 256, 256
      %30 = vsyncadd [#allocation6], %s29
      %s31 = sshll.u32 [#allocation5], 4
      %s32 = int_to_ptr.vmem [resolvable:$true] %s31
      %37 = dma.hbm_to_vmem [thread:$0]  %s1, 256, %s32, [#allocation6], 128, 128, 8
    $region9: #{transformer_conv.1} parent=1 // pred_fallthru
      _
    // Predicated region
    $region10: #{transformer_conv.1} parent=1 // pred_check
      _
    $region11: #{transformer_conv.1} parent=1 // pred_check_branch
      %39 = sbr.rel (0) target = $region13
    $region12: #{transformer_conv.1} parent=1 // pred_region
      %s41 = ssub.s32 256, 256
      %42 = vsyncadd [#allocation6], %s41
      %s43 = sshll.u32 [#allocation7], 4
      %s44 = int_to_ptr.vmem [resolvable:$true] %s43
      %49 = dma.hbm_to_vmem [thread:$0]  %s2, 256, %s44, [#allocation6], 128, 128, 8
    $region13: #{transformer_conv.1} parent=1 // pred_fallthru
      _
    // Predicated region
    $region14: #{transformer_conv.1} parent=1 // pred_check
      _
    $region15: #{transformer_conv.1} parent=1 // pred_check_branch
      %51 = sbr.rel (0) target = $region17
    $region16: #{transformer_conv.1} parent=1 // pred_region
      %s53 = ssub.s32 256, 256
      %54 = vsyncadd [#allocation9], %s53
      %s55 = sshll.u32 [#allocation8], 4
      %s56 = int_to_ptr.vmem [resolvable:$true] %s55
      %61 = dma.hbm_to_vmem [thread:$0]  %s3, 256, %s56, [#allocation9], 128, 128, 8
    $region17: #{transformer_conv.1} parent=1 // pred_fallthru
      _
    // Predicated region
    $region18: #{transformer_conv.1} parent=1 // pred_check
      _
    $region19: #{transformer_conv.1} parent=1 // pred_check_branch
      %63 = sbr.rel (0) target = $region21
    $region20: #{transformer_conv.1} parent=1 // pred_region
      _
    $region21: #{transformer_conv.1} parent=1 // pred_fallthru
      _
    // Predicated region
    $region22: #{transformer_conv.1} parent=1 // pred_check
      _
    $region23: #{transformer_conv.1} parent=1 // pred_check_branch
      %65 = sbr.rel (0) target = $region25
    $region24: #{transformer_conv.1} parent=1 // pred_region
      %66 = dma.done [#allocation3], 256
    $region25: #{transformer_conv.1} parent=1 // pred_fallthru
      _
    // Predicated region
    $region26: #{transformer_conv.1} parent=1 // pred_check
      _
    $region27: #{transformer_conv.1} parent=1 // pred_check_branch
      %68 = sbr.rel (0) target = $region29
    $region28: #{transformer_conv.1} parent=1 // pred_region
      %69 = dma.done [#allocation6], 256
    $region29: #{transformer_conv.1} parent=1 // pred_fallthru
      _
    // Predicated region
    $region30: #{transformer_conv.1} parent=1 // pred_check
      _
    $region31: #{transformer_conv.1} parent=1 // pred_check_branch
      %71 = sbr.rel (0) target = $region33
    $region32: #{transformer_conv.1} parent=1 // pred_region
      %72 = dma.done [#allocation6], 256
    $region33: #{transformer_conv.1} parent=1 // pred_fallthru
      _
    // Predicated region
    $region34: #{transformer_conv.1} parent=1 // pred_check
      _
    $region35: #{transformer_conv.1} parent=1 // pred_check_branch
      %74 = sbr.rel (0) target = $region37
    $region36: #{transformer_conv.1} parent=1 // pred_region
      %75 = dma.done [#allocation9], 256
    $region37: #{transformer_conv.1} parent=1 // pred_fallthru
      _
    %v76 = vld [vmem:[#allocation2] sm:$0xff]
    %v77 = vld [vmem:[#allocation2 + $0x8] sm:$0xff]
    %v78 = vld [vmem:[#allocation5] sm:$0xff]
    %v79 = vld [vmem:[#allocation5 + $0x8] sm:$0xff]
    %v80 = vld [vmem:[#allocation7] sm:$0xff]
    %v81 = vld [vmem:[#allocation7 + $0x8] sm:$0xff]
    %v82 = vld [vmem:[%s4] sm:$0x7]
    %v83 = vld [vmem:[#allocation8] sm:$0xff]
    %v84 = vld [vmem:[#allocation8 + $0x8] sm:$0xff]
    %v85 = vlaneseq
    %v86 = vshrl.u32 %v85, 7
    %v87 = vsub.s32 0, %v86
    %v88 = vrot.slane %v82, %v87
    %vm89 = vcmask 130048
    %v91 = vsel %vm89, %v76, 0
    %v94 = vsel %vm89, %v77, 0
    %96 = vmatprep.subr.mxu0 0.0
    %97 = vmatpush1.msra.mxu0 0.0
    %98 = vmatprep.subr.mxu0 0.0
    %99 = vmatpush1.msra.mxu0 0.0
    %100 = vmatprep.subr.mxu0 0.0
    %101 = vmatpush1.msra.mxu0 0.0
    %102 = vmatprep.subr.mxu0 0.0
    %103 = vmatpush1.msra.mxu0 0.0
    %104 = vmatprep.subr.mxu0 0.0
    %105 = vmatpush1.msra.mxu0 0.0
    %106 = vmatprep.subr.mxu0 0.0
    %107 = vmatpush1.msra.mxu0 0.0
    %108 = vmatprep.subr.mxu0 0.0
    %109 = vmatpush1.msra.mxu0 0.0
    %110 = vmatprep.subr.mxu0 0.0
    %111 = vmatpush1.msra.mxu0 0.0
    %112 = vmatprep.subr.mxu0 0.0
    %113 = vmatpush1.msra.mxu0 0.0
    %114 = vmatprep.subr.mxu0 0.0
    %115 = vmatpush1.msra.mxu0 0.0
    %116 = vmatprep.subr.mxu0 0.0
    %117 = vmatpush1.msra.mxu0 0.0
    %118 = vmatprep.subr.mxu0 0.0
    %119 = vmatpush1.msra.mxu0 0.0
    %120 = vmatprep.subr.mxu0 0.0
    %121 = vmatpush1.msra.mxu0 0.0
    %122 = vmatprep.subr.mxu0 0.0
    %123 = vmatpush1.msra.mxu0 0.0
    %124 = vmatprep.subr.mxu0 0.0
    %125 = vmatpush1.msra.mxu0 %v84
    %126 = vmatprep.subr.mxu0 0.0
    %127 = vmatpush1.msra.mxu0 %v83
    %128 = vmatprep.subr.mxu0 0.0
    %129 = vmatpush2.msra.mxu0 0.0
    %130 = vmatprep.subr.mxu0 0.0
    %131 = vmatpush2.msra.mxu0 0.0
    %132 = vmatprep.subr.mxu0 0.0
    %133 = vmatpush2.msra.mxu0 0.0
    %134 = vmatprep.subr.mxu0 0.0
    %135 = vmatpush2.msra.mxu0 0.0
    %136 = vmatprep.subr.mxu0 0.0
    %137 = vmatpush2.msra.mxu0 0.0
    %138 = vmatprep.subr.mxu0 0.0
    %139 = vmatpush2.msra.mxu0 0.0
    %140 = vmatprep.subr.mxu0 0.0
    %141 = vmatpush2.msra.mxu0 0.0
    %142 = vmatprep.subr.mxu0 0.0
    %143 = vmatpush2.msra.mxu0 0.0
    %144 = vmatprep.subr.mxu0 0.0
    %145 = vmatpush2.msra.mxu0 0.0
    %146 = vmatprep.subr.mxu0 0.0
    %147 = vmatpush2.msra.mxu0 0.0
    %148 = vmatprep.subr.mxu0 0.0
    %149 = vmatpush2.msra.mxu0 0.0
    %150 = vmatprep.subr.mxu0 0.0
    %151 = vmatpush2.msra.mxu0 0.0
    %152 = vmatprep.subr.mxu0 0.0
    %153 = vmatpush2.msra.mxu0 0.0
    %154 = vmatprep.subr.mxu0 0.0
    %155 = vmatpush2.msra.mxu0 0.0
    %156 = vmatprep.subr.mxu0 0.0
    %157 = vmatpush2.msra.mxu0 0.0
    %158 = vmatprep.subr.mxu0 0.0
    %159 = vmatpush2.msra.mxu0 0.0
    %160 = vmatprep.mubr.f32.mxu0 0.0
    %161 = vmatmul.mubr.f32.gmra.mxu0 %v91
    %v162 = vpop.f32.mrf.mxu0
    %v163 = vadd.f32 %v88, %v162
    %v164 = vpop.f32.mrf.mxu0
    %165 = vmatprep.mubr.f32.mxu0 0.0
    %166 = vmatmul.mubr.f32.gmra.mxu0 %v94
    %v167 = vpop.f32.mrf.mxu0
    %v168 = vadd.f32 %v88, %v167
    %v169 = vpop.f32.mrf.mxu0
    %170 = vdwg.mxu0
    %173 = vrot.lane.b32.xlu0 %v163, 96
    %v174 = vpop.permute.xlu0 %173
    %175 = vrot.lane.b32.xlu0 %v168, 96
    %v176 = vpop.permute.xlu0 %175
    %vm177 = vcmask 64512
    %v178 = vsel %vm177, %v163, 0
    %v180 = vsel %vm177, %v168, 0
    %v182 = vsel %vm177, %v174, 0
    %v184 = vsel %vm177, %v176, 0
    %186 = vmatprep.subr.mxu0 0.0
    %187 = vmatpush1.xpose.msra.mxu0 0.0
    %188 = vmatprep.subr.mxu0 0.0
    %189 = vmatpush1.xpose.msra.mxu0 0.0
    %190 = vmatprep.subr.mxu0 0.0
    %191 = vmatpush1.xpose.msra.mxu0 0.0
    %192 = vmatprep.subr.mxu0 0.0
    %193 = vmatpush1.xpose.msra.mxu0 0.0
    %194 = vmatprep.subr.mxu0 0.0
    %195 = vmatpush1.xpose.msra.mxu0 0.0
    %196 = vmatprep.subr.mxu0 0.0
    %197 = vmatpush1.xpose.msra.mxu0 0.0
    %198 = vmatprep.subr.mxu0 0.0
    %199 = vmatpush1.xpose.msra.mxu0 0.0
    %200 = vmatprep.subr.mxu0 0.0
    %201 = vmatpush1.xpose.msra.mxu0 0.0
    %202 = vmatprep.subr.mxu0 0.0
    %203 = vmatpush1.xpose.msra.mxu0 0.0
    %204 = vmatprep.subr.mxu0 0.0
    %205 = vmatpush1.xpose.msra.mxu0 0.0
    %206 = vmatprep.subr.mxu0 0.0
    %207 = vmatpush1.xpose.msra.mxu0 0.0
    %208 = vmatprep.subr.mxu0 0.0
    %209 = vmatpush1.xpose.msra.mxu0 0.0
    %210 = vmatprep.subr.mxu0 0.0
    %211 = vmatpush1.xpose.msra.mxu0 0.0
    %212 = vmatprep.subr.mxu0 0.0
    %213 = vmatpush1.xpose.msra.mxu0 0.0
    %214 = vmatprep.subr.mxu0 0.0
    %215 = vmatpush1.xpose.msra.mxu0 %v184
    %216 = vmatprep.subr.mxu0 0.0
    %217 = vmatpush1.xpose.msra.mxu0 %v182
    %218 = vmatprep.subr.mxu0 0.0
    %219 = vmatpush2.xpose.msra.mxu0 0.0
    %220 = vmatprep.subr.mxu0 0.0
    %221 = vmatpush2.xpose.msra.mxu0 0.0
    %222 = vmatprep.subr.mxu0 0.0
    %223 = vmatpush2.xpose.msra.mxu0 0.0
    %224 = vmatprep.subr.mxu0 0.0
    %225 = vmatpush2.xpose.msra.mxu0 0.0
    %226 = vmatprep.subr.mxu0 0.0
    %227 = vmatpush2.xpose.msra.mxu0 0.0
    %228 = vmatprep.subr.mxu0 0.0
    %229 = vmatpush2.xpose.msra.mxu0 0.0
    %230 = vmatprep.subr.mxu0 0.0
    %231 = vmatpush2.xpose.msra.mxu0 0.0
    %232 = vmatprep.subr.mxu0 0.0
    %233 = vmatpush2.xpose.msra.mxu0 0.0
    %234 = vmatprep.subr.mxu0 0.0
    %235 = vmatpush2.xpose.msra.mxu0 0.0
    %236 = vmatprep.subr.mxu0 0.0
    %237 = vmatpush2.xpose.msra.mxu0 0.0
    %238 = vmatprep.subr.mxu0 0.0
    %239 = vmatpush2.xpose.msra.mxu0 0.0
    %240 = vmatprep.subr.mxu0 0.0
    %241 = vmatpush2.xpose.msra.mxu0 0.0
    %242 = vmatprep.subr.mxu0 0.0
    %243 = vmatpush2.xpose.msra.mxu0 0.0
    %244 = vmatprep.subr.mxu0 0.0
    %245 = vmatpush2.xpose.msra.mxu0 0.0
    %246 = vmatprep.subr.mxu0 0.0
    %247 = vmatpush2.xpose.msra.mxu0 0.0
    %248 = vmatprep.subr.mxu0 0.0
    %249 = vmatpush2.xpose.msra.mxu0 0.0
    %250 = vmatprep.mubr.f32.mxu0 0.0
    %251 = vmatmul.mubr.f32.gmra.mxu0 %v178
    %v252 = vpop.f32.mrf.mxu0
    %v253 = vadd.f32 %v80, %v252
    %v254 = vpop.f32.mrf.mxu0
    %255 = vmatprep.mubr.f32.mxu0 0.0
    %256 = vmatmul.mubr.f32.gmra.mxu0 %v180
    %v257 = vpop.f32.mrf.mxu0
    %v258 = vadd.f32 %v81, %v257
    %v259 = vpop.f32.mrf.mxu0
    %260 = vdwg.mxu0
    %v261 = vsel %vm89, %v253, -inf
    %262 = vmax.xlane.f32.xlu0 %v261
    %v263 = vpop.xlane.xlu0 %262
    %v264 = vsel %vm89, %v258, -inf
    %265 = vmax.xlane.f32.xlu0 %v264
    %v266 = vpop.xlane.xlu0 %265
    %v267 = vsub.f32 %v253, %v263
    %v268 = vsub.f32 %v258, %v266
    %v269 = vmul.f32 %v267, 1.442695
    %v270 = vpow.pop %v269
    %v271 = vmul.f32 %v268, 1.442695
    %v272 = vpow.pop %v271
    %v273 = vmul.f32 %v270, %v78
    %v274 = vmul.f32 %v272, %v79
    %v275 = vsel %vm89, %v273, 0.0
    %276 = vadd.xlane.f32.xlu0 %v275
    %v277 = vpop.xlane.xlu0 %276
    %v278 = vsel %vm89, %v274, 0.0
    %279 = vadd.xlane.f32.xlu0 %v278
    %v280 = vpop.xlane.xlu0 %279
    %vm281 = vcmp.gt.f32.partialorder %v277, 0.0
    %vm282 = vcmp.gt.f32.partialorder %v280, 0.0
    %v283 = vsel %vm281, %v277, 1.0
    %v284 = vsel %vm282, %v280, 1.0
    %v285 = vrcp.pop %v283
    %v286 = vmul.f32 %v273, %v285
    %v287 = vrcp.pop %v284
    %v288 = vmul.f32 %v274, %v287
    %289 = vrot.lane.b32.xlu0 %v163, 64
    %v290 = vpop.permute.xlu0 %289
    %291 = vrot.lane.b32.xlu0 %v168, 64
    %v292 = vpop.permute.xlu0 %291
    %v296 = vsel %vm89, %v286, 0
    %v299 = vsel %vm89, %v288, 0
    %301 = vmatprep.subr.mxu0 0.0
    %302 = vmatpush1.msra.mxu0 0.0
    %303 = vmatprep.subr.mxu0 0.0
    %304 = vmatpush1.msra.mxu0 0.0
    %305 = vmatprep.subr.mxu0 0.0
    %306 = vmatpush1.msra.mxu0 0.0
    %307 = vmatprep.subr.mxu0 0.0
    %308 = vmatpush1.msra.mxu0 0.0
    %309 = vmatprep.subr.mxu0 0.0
    %310 = vmatpush1.msra.mxu0 0.0
    %311 = vmatprep.subr.mxu0 0.0
    %312 = vmatpush1.msra.mxu0 0.0
    %313 = vmatprep.subr.mxu0 0.0
    %314 = vmatpush1.msra.mxu0 0.0
    %315 = vmatprep.subr.mxu0 0.0
    %316 = vmatpush1.msra.mxu0 0.0
    %317 = vmatprep.subr.mxu0 0.0
    %318 = vmatpush1.msra.mxu0 0.0
    %319 = vmatprep.subr.mxu0 0.0
    %320 = vmatpush1.msra.mxu0 0.0
    %321 = vmatprep.subr.mxu0 0.0
    %322 = vmatpush1.msra.mxu0 0.0
    %323 = vmatprep.subr.mxu0 0.0
    %324 = vmatpush1.msra.mxu0 0.0
    %325 = vmatprep.subr.mxu0 0.0
    %326 = vmatpush1.msra.mxu0 0.0
    %327 = vmatprep.subr.mxu0 0.0
    %328 = vmatpush1.msra.mxu0 0.0
    %329 = vmatprep.subr.mxu0 0.0
    %330 = vmatpush1.msra.mxu0 %v292
    %331 = vmatprep.subr.mxu0 0.0
    %332 = vmatpush1.msra.mxu0 %v290
    %333 = vmatprep.subr.mxu0 0.0
    %334 = vmatpush2.msra.mxu0 0.0
    %335 = vmatprep.subr.mxu0 0.0
    %336 = vmatpush2.msra.mxu0 0.0
    %337 = vmatprep.subr.mxu0 0.0
    %338 = vmatpush2.msra.mxu0 0.0
    %339 = vmatprep.subr.mxu0 0.0
    %340 = vmatpush2.msra.mxu0 0.0
    %341 = vmatprep.subr.mxu0 0.0
    %342 = vmatpush2.msra.mxu0 0.0
    %343 = vmatprep.subr.mxu0 0.0
    %344 = vmatpush2.msra.mxu0 0.0
    %345 = vmatprep.subr.mxu0 0.0
    %346 = vmatpush2.msra.mxu0 0.0
    %347 = vmatprep.subr.mxu0 0.0
    %348 = vmatpush2.msra.mxu0 0.0
    %349 = vmatprep.subr.mxu0 0.0
    %350 = vmatpush2.msra.mxu0 0.0
    %351 = vmatprep.subr.mxu0 0.0
    %352 = vmatpush2.msra.mxu0 0.0
    %353 = vmatprep.subr.mxu0 0.0
    %354 = vmatpush2.msra.mxu0 0.0
    %355 = vmatprep.subr.mxu0 0.0
    %356 = vmatpush2.msra.mxu0 0.0
    %357 = vmatprep.subr.mxu0 0.0
    %358 = vmatpush2.msra.mxu0 0.0
    %359 = vmatprep.subr.mxu0 0.0
    %360 = vmatpush2.msra.mxu0 0.0
    %361 = vmatprep.subr.mxu0 0.0
    %362 = vmatpush2.msra.mxu0 0.0
    %363 = vmatprep.subr.mxu0 0.0
    %364 = vmatpush2.msra.mxu0 0.0
    %365 = vmatprep.mubr.f32.mxu0 0.0
    %366 = vmatmul.mubr.f32.gmra.mxu0 %v296
    %v367 = vpop.f32.mrf.mxu0
    %v368 = vadd.f32 0.0, %v367
    %v369 = vpop.f32.mrf.mxu0
    %370 = vmatprep.mubr.f32.mxu0 0.0
    %371 = vmatmul.mubr.f32.gmra.mxu0 %v299
    %v372 = vpop.f32.mrf.mxu0
    %v373 = vadd.f32 0.0, %v372
    %v374 = vpop.f32.mrf.mxu0
    %375 = vdwg.mxu0
    %376 = vrot.lane.b32.xlu0 %v163, 120
    %v377 = vpop.permute.xlu0 %376
    %378 = vrot.lane.b32.xlu0 %v168, 120
    %v379 = vpop.permute.xlu0 %378
    %380 = vrot.lane.b32.xlu0 %v163, 88
    %v381 = vpop.permute.xlu0 %380
    %382 = vrot.lane.b32.xlu0 %v168, 88
    %v383 = vpop.permute.xlu0 %382
    %v384 = vsel %vm177, %v377, 0
    %v386 = vsel %vm177, %v379, 0
    %v388 = vsel %vm177, %v381, 0
    %v390 = vsel %vm177, %v383, 0
    %392 = vmatprep.subr.mxu0 0.0
    %393 = vmatpush1.xpose.msra.mxu0 0.0
    %394 = vmatprep.subr.mxu0 0.0
    %395 = vmatpush1.xpose.msra.mxu0 0.0
    %396 = vmatprep.subr.mxu0 0.0
    %397 = vmatpush1.xpose.msra.mxu0 0.0
    %398 = vmatprep.subr.mxu0 0.0
    %399 = vmatpush1.xpose.msra.mxu0 0.0
    %400 = vmatprep.subr.mxu0 0.0
    %401 = vmatpush1.xpose.msra.mxu0 0.0
    %402 = vmatprep.subr.mxu0 0.0
    %403 = vmatpush1.xpose.msra.mxu0 0.0
    %404 = vmatprep.subr.mxu0 0.0
    %405 = vmatpush1.xpose.msra.mxu0 0.0
    %406 = vmatprep.subr.mxu0 0.0
    %407 = vmatpush1.xpose.msra.mxu0 0.0
    %408 = vmatprep.subr.mxu0 0.0
    %409 = vmatpush1.xpose.msra.mxu0 0.0
    %410 = vmatprep.subr.mxu0 0.0
    %411 = vmatpush1.xpose.msra.mxu0 0.0
    %412 = vmatprep.subr.mxu0 0.0
    %413 = vmatpush1.xpose.msra.mxu0 0.0
    %414 = vmatprep.subr.mxu0 0.0
    %415 = vmatpush1.xpose.msra.mxu0 0.0
    %416 = vmatprep.subr.mxu0 0.0
    %417 = vmatpush1.xpose.msra.mxu0 0.0
    %418 = vmatprep.subr.mxu0 0.0
    %419 = vmatpush1.xpose.msra.mxu0 0.0
    %420 = vmatprep.subr.mxu0 0.0
    %421 = vmatpush1.xpose.msra.mxu0 %v390
    %422 = vmatprep.subr.mxu0 0.0
    %423 = vmatpush1.xpose.msra.mxu0 %v388
    %424 = vmatprep.subr.mxu0 0.0
    %425 = vmatpush2.xpose.msra.mxu0 0.0
    %426 = vmatprep.subr.mxu0 0.0
    %427 = vmatpush2.xpose.msra.mxu0 0.0
    %428 = vmatprep.subr.mxu0 0.0
    %429 = vmatpush2.xpose.msra.mxu0 0.0
    %430 = vmatprep.subr.mxu0 0.0
    %431 = vmatpush2.xpose.msra.mxu0 0.0
    %432 = vmatprep.subr.mxu0 0.0
    %433 = vmatpush2.xpose.msra.mxu0 0.0
    %434 = vmatprep.subr.mxu0 0.0
    %435 = vmatpush2.xpose.msra.mxu0 0.0
    %436 = vmatprep.subr.mxu0 0.0
    %437 = vmatpush2.xpose.msra.mxu0 0.0
    %438 = vmatprep.subr.mxu0 0.0
    %439 = vmatpush2.xpose.msra.mxu0 0.0
    %440 = vmatprep.subr.mxu0 0.0
    %441 = vmatpush2.xpose.msra.mxu0 0.0
    %442 = vmatprep.subr.mxu0 0.0
    %443 = vmatpush2.xpose.msra.mxu0 0.0
    %444 = vmatprep.subr.mxu0 0.0
    %445 = vmatpush2.xpose.msra.mxu0 0.0
    %446 = vmatprep.subr.mxu0 0.0
    %447 = vmatpush2.xpose.msra.mxu0 0.0
    %448 = vmatprep.subr.mxu0 0.0
    %449 = vmatpush2.xpose.msra.mxu0 0.0
    %450 = vmatprep.subr.mxu0 0.0
    %451 = vmatpush2.xpose.msra.mxu0 0.0
    %452 = vmatprep.subr.mxu0 0.0
    %453 = vmatpush2.xpose.msra.mxu0 0.0
    %454 = vmatprep.subr.mxu0 0.0
    %455 = vmatpush2.xpose.msra.mxu0 0.0
    %456 = vmatprep.mubr.f32.mxu0 0.0
    %457 = vmatmul.mubr.f32.gmra.mxu0 %v384
    %v458 = vpop.f32.mrf.mxu0
    %v459 = vadd.f32 %v80, %v458
    %v460 = vpop.f32.mrf.mxu0
    %461 = vmatprep.mubr.f32.mxu0 0.0
    %462 = vmatmul.mubr.f32.gmra.mxu0 %v386
    %v463 = vpop.f32.mrf.mxu0
    %v464 = vadd.f32 %v81, %v463
    %v465 = vpop.f32.mrf.mxu0
    %466 = vdwg.mxu0
    %v467 = vsel %vm89, %v459, -inf
    %468 = vmax.xlane.f32.xlu0 %v467
    %v469 = vpop.xlane.xlu0 %468
    %v470 = vsel %vm89, %v464, -inf
    %471 = vmax.xlane.f32.xlu0 %v470
    %v472 = vpop.xlane.xlu0 %471
    %v473 = vsub.f32 %v459, %v469
    %v474 = vsub.f32 %v464, %v472
    %v475 = vmul.f32 %v473, 1.442695
    %v476 = vpow.pop %v475
    %v477 = vmul.f32 %v474, 1.442695
    %v478 = vpow.pop %v477
    %v479 = vmul.f32 %v476, %v78
    %v480 = vmul.f32 %v478, %v79
    %v481 = vsel %vm89, %v479, 0.0
    %482 = vadd.xlane.f32.xlu0 %v481
    %v483 = vpop.xlane.xlu0 %482
    %v484 = vsel %vm89, %v480, 0.0
    %485 = vadd.xlane.f32.xlu0 %v484
    %v486 = vpop.xlane.xlu0 %485
    %vm487 = vcmp.gt.f32.partialorder %v483, 0.0
    %vm488 = vcmp.gt.f32.partialorder %v486, 0.0
    %v489 = vsel %vm487, %v483, 1.0
    %v490 = vsel %vm488, %v486, 1.0
    %v491 = vrcp.pop %v489
    %v492 = vmul.f32 %v479, %v491
    %v493 = vrcp.pop %v490
    %v494 = vmul.f32 %v480, %v493
    %495 = vrot.lane.b32.xlu0 %v163, 56
    %v496 = vpop.permute.xlu0 %495
    %497 = vrot.lane.b32.xlu0 %v168, 56
    %v498 = vpop.permute.xlu0 %497
    %v502 = vsel %vm89, %v492, 0
    %v505 = vsel %vm89, %v494, 0
    %507 = vmatprep.subr.mxu0 0.0
    %508 = vmatpush1.msra.mxu0 0.0
    %509 = vmatprep.subr.mxu0 0.0
    %510 = vmatpush1.msra.mxu0 0.0
    %511 = vmatprep.subr.mxu0 0.0
    %512 = vmatpush1.msra.mxu0 0.0
    %513 = vmatprep.subr.mxu0 0.0
    %514 = vmatpush1.msra.mxu0 0.0
    %515 = vmatprep.subr.mxu0 0.0
    %516 = vmatpush1.msra.mxu0 0.0
    %517 = vmatprep.subr.mxu0 0.0
    %518 = vmatpush1.msra.mxu0 0.0
    %519 = vmatprep.subr.mxu0 0.0
    %520 = vmatpush1.msra.mxu0 0.0
    %521 = vmatprep.subr.mxu0 0.0
    %522 = vmatpush1.msra.mxu0 0.0
    %523 = vmatprep.subr.mxu0 0.0
    %524 = vmatpush1.msra.mxu0 0.0
    %525 = vmatprep.subr.mxu0 0.0
    %526 = vmatpush1.msra.mxu0 0.0
    %527 = vmatprep.subr.mxu0 0.0
    %528 = vmatpush1.msra.mxu0 0.0
    %529 = vmatprep.subr.mxu0 0.0
    %530 = vmatpush1.msra.mxu0 0.0
    %531 = vmatprep.subr.mxu0 0.0
    %532 = vmatpush1.msra.mxu0 0.0
    %533 = vmatprep.subr.mxu0 0.0
    %534 = vmatpush1.msra.mxu0 0.0
    %535 = vmatprep.subr.mxu0 0.0
    %536 = vmatpush1.msra.mxu0 %v498
    %537 = vmatprep.subr.mxu0 0.0
    %538 = vmatpush1.msra.mxu0 %v496
    %539 = vmatprep.subr.mxu0 0.0
    %540 = vmatpush2.msra.mxu0 0.0
    %541 = vmatprep.subr.mxu0 0.0
    %542 = vmatpush2.msra.mxu0 0.0
    %543 = vmatprep.subr.mxu0 0.0
    %544 = vmatpush2.msra.mxu0 0.0
    %545 = vmatprep.subr.mxu0 0.0
    %546 = vmatpush2.msra.mxu0 0.0
    %547 = vmatprep.subr.mxu0 0.0
    %548 = vmatpush2.msra.mxu0 0.0
    %549 = vmatprep.subr.mxu0 0.0
    %550 = vmatpush2.msra.mxu0 0.0
    %551 = vmatprep.subr.mxu0 0.0
    %552 = vmatpush2.msra.mxu0 0.0
    %553 = vmatprep.subr.mxu0 0.0
    %554 = vmatpush2.msra.mxu0 0.0
    %555 = vmatprep.subr.mxu0 0.0
    %556 = vmatpush2.msra.mxu0 0.0
    %557 = vmatprep.subr.mxu0 0.0
    %558 = vmatpush2.msra.mxu0 0.0
    %559 = vmatprep.subr.mxu0 0.0
    %560 = vmatpush2.msra.mxu0 0.0
    %561 = vmatprep.subr.mxu0 0.0
    %562 = vmatpush2.msra.mxu0 0.0
    %563 = vmatprep.subr.mxu0 0.0
    %564 = vmatpush2.msra.mxu0 0.0
    %565 = vmatprep.subr.mxu0 0.0
    %566 = vmatpush2.msra.mxu0 0.0
    %567 = vmatprep.subr.mxu0 0.0
    %568 = vmatpush2.msra.mxu0 0.0
    %569 = vmatprep.subr.mxu0 0.0
    %570 = vmatpush2.msra.mxu0 0.0
    %571 = vmatprep.mubr.f32.mxu0 0.0
    %572 = vmatmul.mubr.f32.gmra.mxu0 %v502
    %v573 = vpop.f32.mrf.mxu0
    %v574 = vadd.f32 0.0, %v573
    %v575 = vpop.f32.mrf.mxu0
    %576 = vmatprep.mubr.f32.mxu0 0.0
    %577 = vmatmul.mubr.f32.gmra.mxu0 %v505
    %v578 = vpop.f32.mrf.mxu0
    %v579 = vadd.f32 0.0, %v578
    %v580 = vpop.f32.mrf.mxu0
    %581 = vdwg.mxu0
    %582 = vrot.lane.b32.xlu0 %v163, 112
    %v583 = vpop.permute.xlu0 %582
    %584 = vrot.lane.b32.xlu0 %v168, 112
    %v585 = vpop.permute.xlu0 %584
    %586 = vrot.lane.b32.xlu0 %v163, 80
    %v587 = vpop.permute.xlu0 %586
    %588 = vrot.lane.b32.xlu0 %v168, 80
    %v589 = vpop.permute.xlu0 %588
    %v590 = vsel %vm177, %v583, 0
    %v592 = vsel %vm177, %v585, 0
    %v594 = vsel %vm177, %v587, 0
    %v596 = vsel %vm177, %v589, 0
    %598 = vmatprep.subr.mxu0 0.0
    %599 = vmatpush1.xpose.msra.mxu0 0.0
    %600 = vmatprep.subr.mxu0 0.0
    %601 = vmatpush1.xpose.msra.mxu0 0.0
    %602 = vmatprep.subr.mxu0 0.0
    %603 = vmatpush1.xpose.msra.mxu0 0.0
    %604 = vmatprep.subr.mxu0 0.0
    %605 = vmatpush1.xpose.msra.mxu0 0.0
    %606 = vmatprep.subr.mxu0 0.0
    %607 = vmatpush1.xpose.msra.mxu0 0.0
    %608 = vmatprep.subr.mxu0 0.0
    %609 = vmatpush1.xpose.msra.mxu0 0.0
    %610 = vmatprep.subr.mxu0 0.0
    %611 = vmatpush1.xpose.msra.mxu0 0.0
    %612 = vmatprep.subr.mxu0 0.0
    %613 = vmatpush1.xpose.msra.mxu0 0.0
    %614 = vmatprep.subr.mxu0 0.0
    %615 = vmatpush1.xpose.msra.mxu0 0.0
    %616 = vmatprep.subr.mxu0 0.0
    %617 = vmatpush1.xpose.msra.mxu0 0.0
    %618 = vmatprep.subr.mxu0 0.0
    %619 = vmatpush1.xpose.msra.mxu0 0.0
    %620 = vmatprep.subr.mxu0 0.0
    %621 = vmatpush1.xpose.msra.mxu0 0.0
    %622 = vmatprep.subr.mxu0 0.0
    %623 = vmatpush1.xpose.msra.mxu0 0.0
    %624 = vmatprep.subr.mxu0 0.0
    %625 = vmatpush1.xpose.msra.mxu0 0.0
    %626 = vmatprep.subr.mxu0 0.0
    %627 = vmatpush1.xpose.msra.mxu0 %v596
    %628 = vmatprep.subr.mxu0 0.0
    %629 = vmatpush1.xpose.msra.mxu0 %v594
    %630 = vmatprep.subr.mxu0 0.0
    %631 = vmatpush2.xpose.msra.mxu0 0.0
    %632 = vmatprep.subr.mxu0 0.0
    %633 = vmatpush2.xpose.msra.mxu0 0.0
    %634 = vmatprep.subr.mxu0 0.0
    %635 = vmatpush2.xpose.msra.mxu0 0.0
    %636 = vmatprep.subr.mxu0 0.0
    %637 = vmatpush2.xpose.msra.mxu0 0.0
    %638 = vmatprep.subr.mxu0 0.0
    %639 = vmatpush2.xpose.msra.mxu0 0.0
    %640 = vmatprep.subr.mxu0 0.0
    %641 = vmatpush2.xpose.msra.mxu0 0.0
    %642 = vmatprep.subr.mxu0 0.0
    %643 = vmatpush2.xpose.msra.mxu0 0.0
    %644 = vmatprep.subr.mxu0 0.0
    %645 = vmatpush2.xpose.msra.mxu0 0.0
    %646 = vmatprep.subr.mxu0 0.0
    %647 = vmatpush2.xpose.msra.mxu0 0.0
    %648 = vmatprep.subr.mxu0 0.0
    %649 = vmatpush2.xpose.msra.mxu0 0.0
    %650 = vmatprep.subr.mxu0 0.0
    %651 = vmatpush2.xpose.msra.mxu0 0.0
    %652 = vmatprep.subr.mxu0 0.0
    %653 = vmatpush2.xpose.msra.mxu0 0.0
    %654 = vmatprep.subr.mxu0 0.0
    %655 = vmatpush2.xpose.msra.mxu0 0.0
    %656 = vmatprep.subr.mxu0 0.0
    %657 = vmatpush2.xpose.msra.mxu0 0.0
    %658 = vmatprep.subr.mxu0 0.0
    %659 = vmatpush2.xpose.msra.mxu0 0.0
    %660 = vmatprep.subr.mxu0 0.0
    %661 = vmatpush2.xpose.msra.mxu0 0.0
    %662 = vmatprep.mubr.f32.mxu0 0.0
    %663 = vmatmul.mubr.f32.gmra.mxu0 %v590
    %v664 = vpop.f32.mrf.mxu0
    %v665 = vadd.f32 %v80, %v664
    %v666 = vpop.f32.mrf.mxu0
    %667 = vmatprep.mubr.f32.mxu0 0.0
    %668 = vmatmul.mubr.f32.gmra.mxu0 %v592
    %v669 = vpop.f32.mrf.mxu0
    %v670 = vadd.f32 %v81, %v669
    %v671 = vpop.f32.mrf.mxu0
    %672 = vdwg.mxu0
    %v673 = vsel %vm89, %v665, -inf
    %674 = vmax.xlane.f32.xlu0 %v673
    %v675 = vpop.xlane.xlu0 %674
    %v676 = vsel %vm89, %v670, -inf
    %677 = vmax.xlane.f32.xlu0 %v676
    %v678 = vpop.xlane.xlu0 %677
    %v679 = vsub.f32 %v665, %v675
    %v680 = vsub.f32 %v670, %v678
    %v681 = vmul.f32 %v679, 1.442695
    %v682 = vpow.pop %v681
    %v683 = vmul.f32 %v680, 1.442695
    %v684 = vpow.pop %v683
    %v685 = vmul.f32 %v682, %v78
    %v686 = vmul.f32 %v684, %v79
    %v687 = vsel %vm89, %v685, 0.0
    %688 = vadd.xlane.f32.xlu0 %v687
    %v689 = vpop.xlane.xlu0 %688
    %v690 = vsel %vm89, %v686, 0.0
    %691 = vadd.xlane.f32.xlu0 %v690
    %v692 = vpop.xlane.xlu0 %691
    %vm693 = vcmp.gt.f32.partialorder %v689, 0.0
    %vm694 = vcmp.gt.f32.partialorder %v692, 0.0
    %v695 = vsel %vm693, %v689, 1.0
    %v696 = vsel %vm694, %v692, 1.0
    %v697 = vrcp.pop %v695
    %v698 = vmul.f32 %v685, %v697
    %v699 = vrcp.pop %v696
    %v700 = vmul.f32 %v686, %v699
    %701 = vrot.lane.b32.xlu0 %v163, 48
    %v702 = vpop.permute.xlu0 %701
    %703 = vrot.lane.b32.xlu0 %v168, 48
    %v704 = vpop.permute.xlu0 %703
    %v708 = vsel %vm89, %v698, 0
    %v711 = vsel %vm89, %v700, 0
    %713 = vmatprep.subr.mxu0 0.0
    %714 = vmatpush1.msra.mxu0 0.0
    %715 = vmatprep.subr.mxu0 0.0
    %716 = vmatpush1.msra.mxu0 0.0
    %717 = vmatprep.subr.mxu0 0.0
    %718 = vmatpush1.msra.mxu0 0.0
    %719 = vmatprep.subr.mxu0 0.0
    %720 = vmatpush1.msra.mxu0 0.0
    %721 = vmatprep.subr.mxu0 0.0
    %722 = vmatpush1.msra.mxu0 0.0
    %723 = vmatprep.subr.mxu0 0.0
    %724 = vmatpush1.msra.mxu0 0.0
    %725 = vmatprep.subr.mxu0 0.0
    %726 = vmatpush1.msra.mxu0 0.0
    %727 = vmatprep.subr.mxu0 0.0
    %728 = vmatpush1.msra.mxu0 0.0
    %729 = vmatprep.subr.mxu0 0.0
    %730 = vmatpush1.msra.mxu0 0.0
    %731 = vmatprep.subr.mxu0 0.0
    %732 = vmatpush1.msra.mxu0 0.0
    %733 = vmatprep.subr.mxu0 0.0
    %734 = vmatpush1.msra.mxu0 0.0
    %735 = vmatprep.subr.mxu0 0.0
    %736 = vmatpush1.msra.mxu0 0.0
    %737 = vmatprep.subr.mxu0 0.0
    %738 = vmatpush1.msra.mxu0 0.0
    %739 = vmatprep.subr.mxu0 0.0
    %740 = vmatpush1.msra.mxu0 0.0
    %741 = vmatprep.subr.mxu0 0.0
    %742 = vmatpush1.msra.mxu0 %v704
    %743 = vmatprep.subr.mxu0 0.0
    %744 = vmatpush1.msra.mxu0 %v702
    %745 = vmatprep.subr.mxu0 0.0
    %746 = vmatpush2.msra.mxu0 0.0
    %747 = vmatprep.subr.mxu0 0.0
    %748 = vmatpush2.msra.mxu0 0.0
    %749 = vmatprep.subr.mxu0 0.0
    %750 = vmatpush2.msra.mxu0 0.0
    %751 = vmatprep.subr.mxu0 0.0
    %752 = vmatpush2.msra.mxu0 0.0
    %753 = vmatprep.subr.mxu0 0.0
    %754 = vmatpush2.msra.mxu0 0.0
    %755 = vmatprep.subr.mxu0 0.0
    %756 = vmatpush2.msra.mxu0 0.0
    %757 = vmatprep.subr.mxu0 0.0
    %758 = vmatpush2.msra.mxu0 0.0
    %759 = vmatprep.subr.mxu0 0.0
    %760 = vmatpush2.msra.mxu0 0.0
    %761 = vmatprep.subr.mxu0 0.0
    %762 = vmatpush2.msra.mxu0 0.0
    %763 = vmatprep.subr.mxu0 0.0
    %764 = vmatpush2.msra.mxu0 0.0
    %765 = vmatprep.subr.mxu0 0.0
    %766 = vmatpush2.msra.mxu0 0.0
    %767 = vmatprep.subr.mxu0 0.0
    %768 = vmatpush2.msra.mxu0 0.0
    %769 = vmatprep.subr.mxu0 0.0
    %770 = vmatpush2.msra.mxu0 0.0
    %771 = vmatprep.subr.mxu0 0.0
    %772 = vmatpush2.msra.mxu0 0.0
    %773 = vmatprep.subr.mxu0 0.0
    %774 = vmatpush2.msra.mxu0 0.0
    %775 = vmatprep.subr.mxu0 0.0
    %776 = vmatpush2.msra.mxu0 0.0
    %777 = vmatprep.mubr.f32.mxu0 0.0
    %778 = vmatmul.mubr.f32.gmra.mxu0 %v708
    %v779 = vpop.f32.mrf.mxu0
    %v780 = vadd.f32 0.0, %v779
    %v781 = vpop.f32.mrf.mxu0
    %782 = vmatprep.mubr.f32.mxu0 0.0
    %783 = vmatmul.mubr.f32.gmra.mxu0 %v711
    %v784 = vpop.f32.mrf.mxu0
    %v785 = vadd.f32 0.0, %v784
    %v786 = vpop.f32.mrf.mxu0
    %787 = vdwg.mxu0
    %788 = vrot.lane.b32.xlu0 %v163, 104
    %v789 = vpop.permute.xlu0 %788
    %790 = vrot.lane.b32.xlu0 %v168, 104
    %v791 = vpop.permute.xlu0 %790
    %792 = vrot.lane.b32.xlu0 %v163, 72
    %v793 = vpop.permute.xlu0 %792
    %794 = vrot.lane.b32.xlu0 %v168, 72
    %v795 = vpop.permute.xlu0 %794
    %v796 = vsel %vm177, %v789, 0
    %v798 = vsel %vm177, %v791, 0
    %v800 = vsel %vm177, %v793, 0
    %v802 = vsel %vm177, %v795, 0
    %804 = vmatprep.subr.mxu0 0.0
    %805 = vmatpush1.xpose.msra.mxu0 0.0
    %806 = vmatprep.subr.mxu0 0.0
    %807 = vmatpush1.xpose.msra.mxu0 0.0
    %808 = vmatprep.subr.mxu0 0.0
    %809 = vmatpush1.xpose.msra.mxu0 0.0
    %810 = vmatprep.subr.mxu0 0.0
    %811 = vmatpush1.xpose.msra.mxu0 0.0
    %812 = vmatprep.subr.mxu0 0.0
    %813 = vmatpush1.xpose.msra.mxu0 0.0
    %814 = vmatprep.subr.mxu0 0.0
    %815 = vmatpush1.xpose.msra.mxu0 0.0
    %816 = vmatprep.subr.mxu0 0.0
    %817 = vmatpush1.xpose.msra.mxu0 0.0
    %818 = vmatprep.subr.mxu0 0.0
    %819 = vmatpush1.xpose.msra.mxu0 0.0
    %820 = vmatprep.subr.mxu0 0.0
    %821 = vmatpush1.xpose.msra.mxu0 0.0
    %822 = vmatprep.subr.mxu0 0.0
    %823 = vmatpush1.xpose.msra.mxu0 0.0
    %824 = vmatprep.subr.mxu0 0.0
    %825 = vmatpush1.xpose.msra.mxu0 0.0
    %826 = vmatprep.subr.mxu0 0.0
    %827 = vmatpush1.xpose.msra.mxu0 0.0
    %828 = vmatprep.subr.mxu0 0.0
    %829 = vmatpush1.xpose.msra.mxu0 0.0
    %830 = vmatprep.subr.mxu0 0.0
    %831 = vmatpush1.xpose.msra.mxu0 0.0
    %832 = vmatprep.subr.mxu0 0.0
    %833 = vmatpush1.xpose.msra.mxu0 %v802
    %834 = vmatprep.subr.mxu0 0.0
    %835 = vmatpush1.xpose.msra.mxu0 %v800
    %836 = vmatprep.subr.mxu0 0.0
    %837 = vmatpush2.xpose.msra.mxu0 0.0
    %838 = vmatprep.subr.mxu0 0.0
    %839 = vmatpush2.xpose.msra.mxu0 0.0
    %840 = vmatprep.subr.mxu0 0.0
    %841 = vmatpush2.xpose.msra.mxu0 0.0
    %842 = vmatprep.subr.mxu0 0.0
    %843 = vmatpush2.xpose.msra.mxu0 0.0
    %844 = vmatprep.subr.mxu0 0.0
    %845 = vmatpush2.xpose.msra.mxu0 0.0
    %846 = vmatprep.subr.mxu0 0.0
    %847 = vmatpush2.xpose.msra.mxu0 0.0
    %848 = vmatprep.subr.mxu0 0.0
    %849 = vmatpush2.xpose.msra.mxu0 0.0
    %850 = vmatprep.subr.mxu0 0.0
    %851 = vmatpush2.xpose.msra.mxu0 0.0
    %852 = vmatprep.subr.mxu0 0.0
    %853 = vmatpush2.xpose.msra.mxu0 0.0
    %854 = vmatprep.subr.mxu0 0.0
    %855 = vmatpush2.xpose.msra.mxu0 0.0
    %856 = vmatprep.subr.mxu0 0.0
    %857 = vmatpush2.xpose.msra.mxu0 0.0
    %858 = vmatprep.subr.mxu0 0.0
    %859 = vmatpush2.xpose.msra.mxu0 0.0
    %860 = vmatprep.subr.mxu0 0.0
    %861 = vmatpush2.xpose.msra.mxu0 0.0
    %862 = vmatprep.subr.mxu0 0.0
    %863 = vmatpush2.xpose.msra.mxu0 0.0
    %864 = vmatprep.subr.mxu0 0.0
    %865 = vmatpush2.xpose.msra.mxu0 0.0
    %866 = vmatprep.subr.mxu0 0.0
    %867 = vmatpush2.xpose.msra.mxu0 0.0
    %868 = vmatprep.mubr.f32.mxu0 0.0
    %869 = vmatmul.mubr.f32.gmra.mxu0 %v796
    %v870 = vpop.f32.mrf.mxu0
    %v871 = vadd.f32 %v80, %v870
    %v872 = vpop.f32.mrf.mxu0
    %873 = vmatprep.mubr.f32.mxu0 0.0
    %874 = vmatmul.mubr.f32.gmra.mxu0 %v798
    %v875 = vpop.f32.mrf.mxu0
    %v876 = vadd.f32 %v81, %v875
    %v877 = vpop.f32.mrf.mxu0
    %878 = vdwg.mxu0
    %v879 = vsel %vm89, %v871, -inf
    %880 = vmax.xlane.f32.xlu0 %v879
    %v881 = vpop.xlane.xlu0 %880
    %v882 = vsel %vm89, %v876, -inf
    %883 = vmax.xlane.f32.xlu0 %v882
    %v884 = vpop.xlane.xlu0 %883
    %v885 = vsub.f32 %v871, %v881
    %v886 = vsub.f32 %v876, %v884
    %v887 = vmul.f32 %v885, 1.442695
    %v888 = vpow.pop %v887
    %v889 = vmul.f32 %v886, 1.442695
    %v890 = vpow.pop %v889
    %v891 = vmul.f32 %v888, %v78
    %v892 = vmul.f32 %v890, %v79
    %v893 = vsel %vm89, %v891, 0.0
    %894 = vadd.xlane.f32.xlu0 %v893
    %v895 = vpop.xlane.xlu0 %894
    %v896 = vsel %vm89, %v892, 0.0
    %897 = vadd.xlane.f32.xlu0 %v896
    %v898 = vpop.xlane.xlu0 %897
    %vm899 = vcmp.gt.f32.partialorder %v895, 0.0
    %vm900 = vcmp.gt.f32.partialorder %v898, 0.0
    %v901 = vsel %vm899, %v895, 1.0
    %v902 = vsel %vm900, %v898, 1.0
    %v903 = vrcp.pop %v901
    %v904 = vmul.f32 %v891, %v903
    %v905 = vrcp.pop %v902
    %v906 = vmul.f32 %v892, %v905
    %907 = vrot.lane.b32.xlu0 %v163, 40
    %v908 = vpop.permute.xlu0 %907
    %909 = vrot.lane.b32.xlu0 %v168, 40
    %v910 = vpop.permute.xlu0 %909
    %v914 = vsel %vm89, %v904, 0
    %v917 = vsel %vm89, %v906, 0
    %919 = vmatprep.subr.mxu0 0.0
    %920 = vmatpush1.msra.mxu0 0.0
    %921 = vmatprep.subr.mxu0 0.0
    %922 = vmatpush1.msra.mxu0 0.0
    %923 = vmatprep.subr.mxu0 0.0
    %924 = vmatpush1.msra.mxu0 0.0
    %925 = vmatprep.subr.mxu0 0.0
    %926 = vmatpush1.msra.mxu0 0.0
    %927 = vmatprep.subr.mxu0 0.0
    %928 = vmatpush1.msra.mxu0 0.0
    %929 = vmatprep.subr.mxu0 0.0
    %930 = vmatpush1.msra.mxu0 0.0
    %931 = vmatprep.subr.mxu0 0.0
    %932 = vmatpush1.msra.mxu0 0.0
    %933 = vmatprep.subr.mxu0 0.0
    %934 = vmatpush1.msra.mxu0 0.0
    %935 = vmatprep.subr.mxu0 0.0
    %936 = vmatpush1.msra.mxu0 0.0
    %937 = vmatprep.subr.mxu0 0.0
    %938 = vmatpush1.msra.mxu0 0.0
    %939 = vmatprep.subr.mxu0 0.0
    %940 = vmatpush1.msra.mxu0 0.0
    %941 = vmatprep.subr.mxu0 0.0
    %942 = vmatpush1.msra.mxu0 0.0
    %943 = vmatprep.subr.mxu0 0.0
    %944 = vmatpush1.msra.mxu0 0.0
    %945 = vmatprep.subr.mxu0 0.0
    %946 = vmatpush1.msra.mxu0 0.0
    %947 = vmatprep.subr.mxu0 0.0
    %948 = vmatpush1.msra.mxu0 %v910
    %949 = vmatprep.subr.mxu0 0.0
    %950 = vmatpush1.msra.mxu0 %v908
    %951 = vmatprep.subr.mxu0 0.0
    %952 = vmatpush2.msra.mxu0 0.0
    %953 = vmatprep.subr.mxu0 0.0
    %954 = vmatpush2.msra.mxu0 0.0
    %955 = vmatprep.subr.mxu0 0.0
    %956 = vmatpush2.msra.mxu0 0.0
    %957 = vmatprep.subr.mxu0 0.0
    %958 = vmatpush2.msra.mxu0 0.0
    %959 = vmatprep.subr.mxu0 0.0
    %960 = vmatpush2.msra.mxu0 0.0
    %961 = vmatprep.subr.mxu0 0.0
    %962 = vmatpush2.msra.mxu0 0.0
    %963 = vmatprep.subr.mxu0 0.0
    %964 = vmatpush2.msra.mxu0 0.0
    %965 = vmatprep.subr.mxu0 0.0
    %966 = vmatpush2.msra.mxu0 0.0
    %967 = vmatprep.subr.mxu0 0.0
    %968 = vmatpush2.msra.mxu0 0.0
    %969 = vmatprep.subr.mxu0 0.0
    %970 = vmatpush2.msra.mxu0 0.0
    %971 = vmatprep.subr.mxu0 0.0
    %972 = vmatpush2.msra.mxu0 0.0
    %973 = vmatprep.subr.mxu0 0.0
    %974 = vmatpush2.msra.mxu0 0.0
    %975 = vmatprep.subr.mxu0 0.0
    %976 = vmatpush2.msra.mxu0 0.0
    %977 = vmatprep.subr.mxu0 0.0
    %978 = vmatpush2.msra.mxu0 0.0
    %979 = vmatprep.subr.mxu0 0.0
    %980 = vmatpush2.msra.mxu0 0.0
    %981 = vmatprep.subr.mxu0 0.0
    %982 = vmatpush2.msra.mxu0 0.0
    %983 = vmatprep.mubr.f32.mxu0 0.0
    %984 = vmatmul.mubr.f32.gmra.mxu0 %v914
    %v985 = vpop.f32.mrf.mxu0
    %v986 = vadd.f32 0.0, %v985
    %v987 = vpop.f32.mrf.mxu0
    %988 = vmatprep.mubr.f32.mxu0 0.0
    %989 = vmatmul.mubr.f32.gmra.mxu0 %v917
    %v990 = vpop.f32.mrf.mxu0
    %v991 = vadd.f32 0.0, %v990
    %v992 = vpop.f32.mrf.mxu0
    %993 = vdwg.mxu0
    %996 = vrot.lane.b32.xlu0 %v574, 8
    %v997 = vpop.permute.xlu0 %996
    %998 = vrot.lane.b32.xlu0 %v579, 8
    %v999 = vpop.permute.xlu0 %998
    %1004 = vrot.lane.b32.xlu0 %v780, 16
    %v1005 = vpop.permute.xlu0 %1004
    %1006 = vrot.lane.b32.xlu0 %v785, 16
    %v1007 = vpop.permute.xlu0 %1006
    %1012 = vrot.lane.b32.xlu0 %v986, 24
    %v1013 = vpop.permute.xlu0 %1012
    %1014 = vrot.lane.b32.xlu0 %v991, 24
    %v1015 = vpop.permute.xlu0 %1014
    %v1018 = vsel %vm177, %v368, %v997
    %v1019 = vsel %vm177, %v373, %v999
    %v1020 = vsel %vm89, %v1018, %v1005
    %v1021 = vsel %vm89, %v1019, %v1007
    %vm1022 = vcmask 195584
    %v1023 = vsel %vm1022, %v1020, %v1013
    %v1024 = vsel %vm1022, %v1021, %v1015
    %1025 = vrot.lane.b32.xlu0 %v163, 32
    %v1026 = vpop.permute.xlu0 %1025
    %1027 = vrot.lane.b32.xlu0 %v168, 32
    %v1028 = vpop.permute.xlu0 %1027
    %v1031 = vadd.f32 %v1023, %v1026
    %v1032 = vadd.f32 %v1024, %v1028
    %vm1033 = vcmask 261120
    %v1034 = vsel %vm1033, %v1031, 0.0
    %1035 = vadd.xlane.f32.xlu0 %v1034
    %v1036 = vpop.xlane.xlu0 %1035
    %v1037 = vsel %vm1033, %v1032, 0.0
    %1038 = vadd.xlane.f32.xlu0 %v1037
    %v1039 = vpop.xlane.xlu0 %1038
    %v1040 = vrcp.pop 32.0
    %v1041 = vmul.f32 %v1036, %v1040
    %v1042 = vmul.f32 %v1039, %v1040
    %v1043 = vsub.f32 %v1031, %v1041
    %v1044 = vsub.f32 %v1032, %v1042
    %v1045 = vmul.f32 %v1043, %v1043
    %v1046 = vmul.f32 %v1044, %v1044
    %v1047 = vsel %vm1033, %v1045, 0.0
    %1048 = vadd.xlane.f32.xlu0 %v1047
    %v1049 = vpop.xlane.xlu0 %1048
    %v1050 = vsel %vm1033, %v1046, 0.0
    %1051 = vadd.xlane.f32.xlu0 %v1050
    %v1052 = vpop.xlane.xlu0 %1051
    %v1053 = vmul.f32 %v1049, %v1040
    %v1054 = vmul.f32 %v1052, %v1040
    %v1055 = vadd.f32 %v1053, 1e-05
    %v1056 = vadd.f32 %v1054, 1e-05
    %v1057 = vrsqrt.pop %v1055
    %v1058 = vrsqrt.pop %v1056
    %v1059 = vmul.f32 %v1043, %v1057
    %v1060 = vmul.f32 %v1044, %v1058
    %v1061 = vlaneseq
    %v1062 = vshrl.u32 %v1061, 7
    %v1063 = vsub.s32 1, %v1062
    %v1064 = vrot.slane %v82, %v1063
    %v1065 = vmul.f32 %v1059, %v1064
    %v1066 = vmul.f32 %v1060, %v1064
    %v1067 = vlaneseq
    %v1068 = vshrl.u32 %v1067, 7
    %v1069 = vsub.s32 2, %v1068
    %v1070 = vrot.slane %v82, %v1069
    %v1071 = vadd.f32 %v1065, %v1070
    %v1072 = vadd.f32 %v1066, %v1070
    %v1073 = vsel %vm1033, %v1071, 0.0
    %v1074 = vsel %vm1033, %v1072, 0.0
    %1075 = vst [vmem:[#allocation10] sm:$0xff] %v1073
    %1076 = vst [vmem:[#allocation10 + $0x8] sm:$0xff] %v1074
    // Predicated region
    $region38: #{transformer_conv.1} parent=1 // pred_check
      _
    $region39: #{transformer_conv.1} parent=1 // pred_check_branch
      %1078 = sbr.rel (0) target = $region41
    $region40: #{transformer_conv.1} parent=1 // pred_region
      %s1080 = ssub.s32 256, 256
      %1081 = vsyncadd [#allocation4], %s1080
      %s1082 = sshll.u32 [#allocation10], 4
      %s1083 = int_to_ptr.vmem [resolvable:$true] %s1082
      %1088 = dma.vmem_to_hbm [thread:$0]  %s1083, 256, %s5, [#allocation4], 128, 128, 8
    $region41: #{transformer_conv.1} parent=1 // pred_fallthru
      _
    // Predicated region
    $region42: #{transformer_conv.1} parent=1 // pred_check
      _
    $region43: #{transformer_conv.1} parent=1 // pred_check_branch
      %1090 = sbr.rel (0) target = $region45
    $region44: #{transformer_conv.1} parent=1 // pred_region
      %1091 = dma.done [#allocation4], 256
    $region45: #{transformer_conv.1} parent=1 // pred_fallthru
      _
    %1092 = vsyncpa [#allocation3], 1
    %1093 = vsyncpa [#allocation6], 1
    %1094 = vsyncpa [#allocation9], 1
    %1095 = vsyncpa [#allocation4], 1

</llo_original>
